<compile_context>
chip_gen: v5e
topology: v5e:2x2
jax: 0.10.0
libtpu: 0.0.40
codegen_flags: <defaults>
</compile_context>

<pallas_src>
import functools

import jax
import jax.numpy as jnp
from jax import lax
from jax.experimental import pallas as pl
from jax.experimental.pallas import tpu as pltpu


def _ce_label_smooth_kernel(x_ref, tgt_ref, loss_ref, *, on_weight, off_weight):
    x = x_ref[...].astype(jnp.float32)          # (tile_n, C)
    tgt = tgt_ref[...]                          # (tile_n, 1) int32

    # Numerically stable log-sum-exp pieces (row-wise over the class axis).
    x_max = jnp.max(x, axis=1, keepdims=True)                        # (tile_n, 1)
    shifted = x - x_max                                              # (tile_n, C)
    lse = jnp.log(jnp.sum(jnp.exp(shifted), axis=1, keepdims=True))  # (tile_n, 1)

    # Smoothed one-hot weights built via iota-compare (no gather / scatter):
    #   w[row, c] = eps/C + (1-eps) * (c == target[row])
    class_ids = lax.broadcasted_iota(jnp.int32, x.shape, 1)
    w = jnp.where(class_ids == tgt, on_weight, off_weight)           # (tile_n, C)
    weighted = jnp.sum(shifted * w, axis=1, keepdims=True)           # (tile_n, 1)

    # loss_row = -sum(smoothed * log_probs)
    #          = -sum(smoothed * (shifted - lse))
    #          = lse * sum(smoothed) - sum(smoothed * shifted)   [sum(smoothed)=1]
    loss_ref[...] = lse - weighted


def _round_up(x, m):
    return (x + m - 1) // m * m


def _vmem_capacity_bytes():
    """Physical per-core VMEM; conservative fallback if the query is absent."""
    try:
        get_info = getattr(pltpu, "get_tpu_info", None)
        if get_info is not None:
            cap = getattr(get_info(), "vmem_capacity_bytes", None)
            if cap:
                return int(cap)
    except Exception:
        pass
    return 64 * 1024 * 1024  # v7x per-TensorCore VMEM (smallest of the fleet)


def _pick_tile_n(n, c, tile_budget_bytes):
    """Largest batch tile (multiple of 8, <=1024 rows) fitting the VMEM budget.

    Per-row footprint of the double-buffered pipeline:
      logits tile : 2 * C * 4 bytes
      targets tile: 2 * 512 bytes   ((tile_n, 1) int32 pads to a full lane tile)
      loss tile   : 2 * 512 bytes
    """
    bytes_per_row = 8 * c + 2048
    tile = min(tile_budget_bytes // bytes_per_row, 1024, _round_up(n, 8))
    return max(8, (tile // 8) * 8)


def cross_entropy_label_smooth(inputs, targets, *, num_classes, epsilon,
                               tile_n=None):
    """Pallas equivalent of CrossEntropyLabelSmooth.forward.

    inputs:  (N, C) float logits
    targets: (N,)   int class indices
    returns: scalar float32 loss
    """
    n, c = inputs.shape
    assert c == num_classes

    vmem_cap = _vmem_capacity_bytes()
    # Explicit VMEM limit with headroom (default scoped limit is only
    # 16 MiB on v5e / 32 MiB on v6e-v7x and would silently cap the tiles).
    vmem_limit_bytes = int(min(vmem_cap * 3 // 4, 96 * 1024 * 1024))

    if tile_n is None:
        tile_n = _pick_tile_n(n, c, int(vmem_limit_bytes * 0.7))
    assert tile_n % 8 == 0, "tile_n must be a multiple of 8"

    # Pad the batch so it divides evenly; padded rows produce finite losses
    # (zero logits, target 0) and are dropped before the final sum.
    n_pad = _round_up(n, tile_n)
    if n_pad != n:
        inputs = jnp.pad(inputs, ((0, n_pad - n), (0, 0)))
        targets = jnp.pad(targets, ((0, n_pad - n),))
    targets2d = targets.astype(jnp.int32).reshape(n_pad, 1)

    eps = float(epsilon)
    grid = (n_pad // tile_n,)
    kernel = functools.partial(
        _ce_label_smooth_kernel,
        on_weight=1.0 - eps + eps / float(num_classes),
        off_weight=eps / float(num_classes),
    )

    per_row = pl.pallas_call(
        kernel,
        out_shape=jax.ShapeDtypeStruct((n_pad, 1), jnp.float32),
        grid_spec=pltpu.PrefetchScalarGridSpec(
            num_scalar_prefetch=0,
            grid=grid,
            in_specs=[
                pl.BlockSpec((tile_n, c), lambda i: (i, 0)),
                pl.BlockSpec((tile_n, 1), lambda i: (i, 0)),
            ],
            out_specs=pl.BlockSpec((tile_n, 1), lambda i: (i, 0)),
        ),
        compiler_params=pltpu.CompilerParams(
            dimension_semantics=("parallel",),
            vmem_limit_bytes=vmem_limit_bytes,
        ),
    )(inputs, targets2d)

    # (-targets * log_probs).mean(0).sum() == sum(per_row_losses) / N
    return jnp.sum(per_row[:n, 0]) / jnp.float32(n)


def _reference(inputs, targets, num_classes, epsilon):
    log_probs = jax.nn.log_softmax(inputs.astype(jnp.float32), axis=1)
    one_hot = jax.nn.one_hot(targets, num_classes, dtype=jnp.float32)
    smoothed = (1.0 - epsilon) * one_hot + epsilon / num_classes
    return jnp.sum(jnp.mean(-smoothed * log_probs, axis=0))


if __name__ == "__main__":
    key = jax.random.PRNGKey(0)
    k1, k2, k3, k4 = jax.random.split(key, 4)

    # Test 1: small shapes matching the module (auto tile, single block).
    num_classes = 16
    epsilon = 0.1
    batch = 16
    logits = jax.random.normal(k1, (batch, num_classes), dtype=jnp.float32)
    targets = jax.random.randint(k2, (batch,), 0, num_classes, dtype=jnp.int32)
    loss = cross_entropy_label_smooth(
        logits, targets, num_classes=num_classes, epsilon=epsilon
    )
    loss = jax.block_until_ready(loss)
    ref = _reference(logits, targets, num_classes, epsilon)
    assert jnp.allclose(loss, ref, rtol=1e-5, atol=1e-5), (loss, ref)

    # Test 2: batch not a multiple of the tile, C not a multiple of 128,
    # multiple grid steps (forced tile_n=8) — exercises padding + pipeline.
    nc2, eps2, b2 = 48, 0.05, 20
    logits2 = jax.random.normal(k3, (b2, nc2), dtype=jnp.float32)
    targets2 = jax.random.randint(k4, (b2,), 0, nc2, dtype=jnp.int32)
    loss2 = cross_entropy_label_smooth(
        logits2, targets2, num_classes=nc2, epsilon=eps2, tile_n=8
    )
    loss2 = jax.block_until_ready(loss2)
    ref2 = _reference(logits2, targets2, nc2, eps2)
    assert jnp.allclose(loss2, ref2, rtol=1e-5, atol=1e-5), (loss2, ref2)

    print("KERNEL_OK")
</pallas_src>

<mosaic_0001>
module attributes {stable_mosaic.version = 11 : i64} {
  func.func @_ce_label_smooth_kernel(%arg0: i32, %arg1: memref<16x16xf32, #tpu.memory_space<vmem>>, %arg2: memref<16x1xi32, #tpu.memory_space<vmem>>, %arg3: memref<16x1xf32, #tpu.memory_space<vmem>>) attributes {dimension_semantics = [#tpu.dimension_semantics<parallel>], iteration_bounds = array<i64: 1>, scalar_prefetch = 0 : i64, scratch_operands = 0 : i64, tpu.core_type = #tpu.core_type<tc>, window_params = [{transform_indices = @transform_0, window_bounds = array<i64: 16, 16>}, {transform_indices = @transform_1, window_bounds = array<i64: 16, 1>}, {transform_indices = @transform_2, window_bounds = array<i64: 16, 1>}]} {
    %c0 = arith.constant 0 : index
    %c0_0 = arith.constant 0 : index
    %0 = vector.load %arg1[%c0, %c0_0] : memref<16x16xf32, #tpu.memory_space<vmem>>, vector<16x16xf32>
    %c0_1 = arith.constant 0 : index
    %c0_2 = arith.constant 0 : index
    %1 = vector.load %arg2[%c0_1, %c0_2] : memref<16x1xi32, #tpu.memory_space<vmem>>, vector<16x1xi32>
    %cst = arith.constant dense<0xFF800000> : vector<16xf32>
    %2 = vector.multi_reduction <maximumf>, %0, %cst [1] : vector<16x16xf32> to vector<16xf32>
    %3 = vector.shape_cast %2 : vector<16xf32> to vector<16x1xf32>
    %4 = vector.broadcast %3 : vector<16x1xf32> to vector<16x16xf32>
    %5 = arith.subf %0, %4 : vector<16x16xf32>
    %6 = math.exp %5 : vector<16x16xf32>
    %cst_3 = arith.constant dense<0.000000e+00> : vector<16xf32>
    %7 = vector.multi_reduction <add>, %6, %cst_3 [1] : vector<16x16xf32> to vector<16xf32>
    %8 = vector.shape_cast %7 : vector<16xf32> to vector<16x1xf32>
    %9 = math.log %8 : vector<16x1xf32>
    %10 = tpu.iota {dimensions = array<i32: 1>} : vector<16x16xi32>
    %11 = vector.broadcast %1 : vector<16x1xi32> to vector<16x16xi32>
    %12 = arith.cmpi eq, %10, %11 : vector<16x16xi32>
    %cst_4 = arith.constant 9.062500e-01 : f32
    %cst_5 = arith.constant 6.250000e-03 : f32
    %13 = vector.broadcast %cst_4 : f32 to vector<16x16xf32>
    %14 = vector.broadcast %cst_5 : f32 to vector<16x16xf32>
    %15 = arith.select %12, %13, %14 : vector<16x16xi1>, vector<16x16xf32>
    %16 = arith.mulf %5, %15 : vector<16x16xf32>
    %cst_6 = arith.constant dense<0.000000e+00> : vector<16xf32>
    %17 = vector.multi_reduction <add>, %16, %cst_6 [1] : vector<16x16xf32> to vector<16xf32>
    %18 = vector.shape_cast %17 : vector<16xf32> to vector<16x1xf32>
    %19 = arith.subf %9, %18 : vector<16x1xf32>
    %c0_7 = arith.constant 0 : index
    %c0_8 = arith.constant 0 : index
    %20 = vector.load %arg3[%c0_7, %c0_8] : memref<16x1xf32, #tpu.memory_space<vmem>>, vector<16x1xf32>
    tpu.vector_store %arg3[%c0_7, %c0_8], %19 {strides = array<i32>} : memref<16x1xf32, #tpu.memory_space<vmem>>, vector<16x1xf32>,
    return
  }
  func.func @transform_0(%arg0: i32) -> (i32, i32) {
    %c0_i32 = arith.constant 0 : i32
    %c0_i32_0 = arith.constant 0 : i32
    return %arg0, %c0_i32 : i32, i32
  }
  func.func @transform_1(%arg0: i32) -> (i32, i32) {
    %c0_i32 = arith.constant 0 : i32
    %c0_i32_0 = arith.constant 0 : i32
    return %arg0, %c0_i32 : i32, i32
  }
  func.func @transform_2(%arg0: i32) -> (i32, i32) {
    %c0_i32 = arith.constant 0 : i32
    %c0_i32_0 = arith.constant 0 : i32
    return %arg0, %c0_i32 : i32, i32
  }
}

</mosaic_0001>

<llo_original>
// kernel: tpu_custom_call.1
$region0: #{tpu_custom_call.1}
  #allocation0 [shape = 'u32[]', space=smem, size = 0x4, offset = 0x4, fixed_abs, tag = 'smem constant byte address 0x4 - core index']
  #allocation1 [shape = 'u32[72,128]{1,0:T(1,128)}', space=vmem, size = 0x9000, scoped, tag = 'internal scratch']
  %s0 = inlined_call_operand.vmem [shape: f32[16,16], index: 0, kind: input, shape index: {}]
  %s1 = inlined_call_operand.vmem [shape: s32[16,1], index: 1, kind: input, shape index: {}]
  %s2 = inlined_call_operand.vmem [shape: f32[16,1], index: 2, kind: output, shape index: {}]
  %s3 = sld [smem:[#allocation0]]
  $region18: #{tpu_custom_call.1} parent=0
    _
  %s5 = ssub.s32 1, %s3
  %s6 = scalar_select 0, %s5, %s3
  // Predicated region
  $region2: #{tpu_custom_call.1} parent=0 // pred_check
    _
  $region3: #{tpu_custom_call.1} parent=0 // pred_check_branch
    %8 = sbr.rel (0) target = $region5
  $region4: #{tpu_custom_call.1} parent=0 // pred_region
    _
  $region5: #{tpu_custom_call.1} parent=0 // pred_fallthru
    _
  // Predicated region
  $region6: #{tpu_custom_call.1} parent=0 // pred_check
    _
  $region7: #{tpu_custom_call.1} parent=0 // pred_check_branch
    %10 = sbr.rel (0) target = $region9
  $region8: #{tpu_custom_call.1} parent=0 // pred_region
    _
  $region9: #{tpu_custom_call.1} parent=0 // pred_fallthru
    _
  %v11 = vld [vmem:[%s0] sm:$0xff]
  %v12 = vld [vmem:[%s0 + $0x8] sm:$0xff]
  %v13 = vld [vmem:[%s1] sm:$0xff]
  %v14 = vld [vmem:[%s1 + $0x8] sm:$0xff]
  %vm15 = vcmask 130048
  %v16 = vsel %vm15, %v11, -inf
  %17 = vmax.xlane.f32.xlu0 %v16
  %v18 = vpop.xlane.xlu0 %17
  %v19 = vsel %vm15, %v12, -inf
  %20 = vmax.xlane.f32.xlu0 %v19
  %v21 = vpop.xlane.xlu0 %20
  %v22 = vsub.f32 %v11, %v18
  %v23 = vsub.f32 %v12, %v21
  %v24 = vmul.f32 %v22, 1.442695
  %v25 = vpow.pop %v24
  %v26 = vmul.f32 %v23, 1.442695
  %v27 = vpow.pop %v26
  %v28 = vsel %vm15, %v25, 0.0
  %29 = vadd.xlane.f32.xlu0 %v28
  %v30 = vpop.xlane.xlu0 %29
  %v31 = vsel %vm15, %v27, 0.0
  %32 = vadd.xlane.f32.xlu0 %v31
  %v33 = vpop.xlane.xlu0 %32
  %v34 = vlog2.pop %v30
  %v35 = vmul.f32 %v34, 0.6931472
  %v36 = vlog2.pop %v33
  %v37 = vmul.f32 %v36, 0.6931472
  %v38 = vlaneseq
  %v39 = vand.u32 %v38, 127
  %40 = vset.pattern.permute.xlu0 0
  %41 = vperm.xlu0 %40, %v13
  %v42 = vpop.permute.xlu0 %41
  %43 = vset.pattern.permute.xlu0 0
  %44 = vperm.xlu0 %43, %v14
  %v45 = vpop.permute.xlu0 %44
  %vm46 = vcmp.eq.s32.totalorder %v39, %v42
  %vm47 = vcmp.eq.s32.totalorder %v39, %v45
  %v48 = vsel %vm46, 0.90625, 0.00625
  %v49 = vsel %vm47, 0.90625, 0.00625
  %v50 = vmul.f32 %v22, %v48
  %v51 = vmul.f32 %v23, %v49
  %v52 = vsel %vm15, %v50, 0.0
  %53 = vadd.xlane.f32.xlu0 %v52
  %v54 = vpop.xlane.xlu0 %53
  %v55 = vsel %vm15, %v51, 0.0
  %56 = vadd.xlane.f32.xlu0 %v55
  %v57 = vpop.xlane.xlu0 %56
  %v58 = vsub.f32 %v35, %v54
  %v59 = vsub.f32 %v37, %v57
  %vm60 = vcmask 7168
  %61 = vst.msk [vmem:[%s2] sm:$0xff] %vm60, %v58
  %62 = vst.msk [vmem:[%s2 + $0x8] sm:$0xff] %vm60, %v59
  // Predicated region
  $region10: #{tpu_custom_call.1} parent=0 // pred_check
    _
  $region11: #{tpu_custom_call.1} parent=0 // pred_check_branch
    %64 = sbr.rel (0) target = $region13
  $region12: #{tpu_custom_call.1} parent=0 // pred_region
    _
  $region13: #{tpu_custom_call.1} parent=0 // pred_fallthru
    _
  // Predicated region
  $region14: #{tpu_custom_call.1} parent=0 // pred_check
    _
  $region15: #{tpu_custom_call.1} parent=0 // pred_check_branch
    %66 = sbr.rel (0) target = $region17
  $region16: #{tpu_custom_call.1} parent=0 // pred_region
    _
  $region17: #{tpu_custom_call.1} parent=0 // pred_fallthru
    _

</llo_original>
